<compile_context>
chip_gen: v5e
topology: v5e:2x2
jax: 0.10.0
libtpu: 0.0.40
codegen_flags: <defaults>
</compile_context>

<pallas_src>
import jax
import jax.numpy as jnp
from jax.experimental import pallas as pl
from jax.experimental.pallas import tpu as pltpu

ETA = 0.1   # stand-in for args.eta (a module-level global in the reference script)
# TODO(synk): if eta must vary at runtime, pass it as an SMEM scalar instead of
#             baking it into the trace.

_LANES = 128            # lane width of one vreg row
_SUBLANES = 8
_MAX_BLOCK_ROWS = 2048  # 1 MiB f32 per block buffer
_MIN_GRID = 4           # target grid steps for megacore sharding (v7x)


def permutation_tensor(n: int) -> jnp.ndarray:
    M = jnp.eye(n, dtype=jnp.float32)
    return jnp.concatenate([M[n // 2:], -M[: n // 2]], axis=0)


def _round_up(x: int, m: int) -> int:
    return ((x + m - 1) // m) * m


def pendulum_kernel(x_ref, out_ref):
    # x_ref: (block_rows, 128) f32, lanes interleaved as q0,p0,q1,p1,...
    # 128 is even, so (q, p) pairs never straddle a row; the roll wrap-around at
    # lanes 0/127 only lands on lanes that the jnp.where below discards.
    x = x_ref[...]

    # Lane-parity mask from a (1, 128) iota; broadcasting expands it in where.
    lane = jax.lax.broadcasted_iota(jnp.int32, (1, _LANES), 1)
    is_q_lane = (lane & 1) == 0

    # XLU lane rotations (separate issue slot from VPU/EUP work). pltpu.roll
    # follows jnp.roll semantics: result[i] = x[(i - shift) mod 128].
    p_at_q_lane = pltpu.roll(x, _LANES - 1, axis=1)   # brings x[i+1] -> lane i
    q_at_p_lane = pltpu.roll(x, 1, axis=1)            # brings x[i-1] -> lane i

    # Fused algebra of (dH @ M^T) - eta * dH_with_col0_zeroed:
    #   even (q) lanes: out = 2*p
    #   odd  (p) lanes: out = -3*sin(q) - 2*eta*p
    out_q = 2.0 * p_at_q_lane
    out_p = jnp.sin(q_at_p_lane) * (-3.0) - (2.0 * ETA) * x
    out_ref[...] = jnp.where(is_q_lane, out_q, out_p)


@jax.jit
def ode_pendulum_field(x: jnp.ndarray) -> jnp.ndarray:
    """field = (dH @ M^T) - eta * dH_with_col0_zeroed, x: (B, 2) float32.

    Shapes are static under jit, so each distinct B compiles once; callers
    driving an ODE integrator should bucket/pad B outside this function so the
    compiled kernel is reused across solver steps.
    """
    B, N = x.shape                    # N == 2 (q, p)
    total = B * N

    # Pad the flat stream only up to the next 8*128 elements (<= 4 KiB extra
    # traffic); skip padding entirely when already aligned.
    padded_total = _round_up(total, _SUBLANES * _LANES)
    pad = padded_total - total
    xf = x.astype(jnp.float32).reshape(-1)
    if pad:
        xf = jnp.pad(xf, (0, pad))
    rows = padded_total // _LANES     # multiple of 8 sublanes
    x2d = xf.reshape(rows, _LANES)    # free row-major reshape

    # Largest block (fewest grid steps, less per-step overhead) that still
    # leaves >= _MIN_GRID steps when the problem is big enough for megacore
    # sharding to matter. Always a multiple of 8 rows and never exceeds `rows`.
    block_rows = max(_SUBLANES,
                     min(_MAX_BLOCK_ROWS,
                         _round_up(pl.cdiv(rows, _MIN_GRID), _SUBLANES)))
    block_rows = min(block_rows, rows)
    grid = pl.cdiv(rows, block_rows)  # remainder block is masked by Pallas

    out2d = pl.pallas_call(
        pendulum_kernel,
        out_shape=jax.ShapeDtypeStruct((rows, _LANES), jnp.float32),
        grid=(grid,),
        in_specs=[pl.BlockSpec((block_rows, _LANES), lambda i: (i, 0))],
        out_specs=pl.BlockSpec((block_rows, _LANES), lambda i: (i, 0)),
        compiler_params=pltpu.CompilerParams(
            dimension_semantics=("parallel",)),
    )(x2d)

    out = out2d.reshape(-1)
    if pad:
        out = out[:total]
    return out.reshape(B, N)


def ode_pendulum_field_ref(x: jnp.ndarray, M: jnp.ndarray) -> jnp.ndarray:
    """Pure-JAX reference matching the PyTorch forward."""
    q = x[:, 0]
    p = x[:, 1]
    dH = jnp.stack([3.0 * jnp.sin(q), 2.0 * p], axis=1)
    field = dH @ M.T
    dH = dH.at[:, 0].set(0.0)
    return field - ETA * dH


if __name__ == "__main__":
    key = jax.random.PRNGKey(0)
    M = permutation_tensor(2)

    # Small deterministic tests (second size exercises a partial padded row).
    for B in (8, 300):
        key, sub = jax.random.split(key)
        x = jax.random.normal(sub, (B, 2), dtype=jnp.float32)

        out = ode_pendulum_field(x)
        jax.block_until_ready(out)

        ref = ode_pendulum_field_ref(x, M)
        assert out.shape == (B, 2) and out.dtype == jnp.float32
        assert jnp.allclose(out, ref, atol=1e-5, rtol=1e-5), (B, out, ref)

    print("KERNEL_OK")
</pallas_src>

<mosaic_0001>
module attributes {stable_mosaic.version = 11 : i64} {
  func.func @pendulum_kernel(%arg0: i32, %arg1: memref<8x128xf32, #tpu.memory_space<vmem>>, %arg2: memref<8x128xf32, #tpu.memory_space<vmem>>) attributes {dimension_semantics = [#tpu.dimension_semantics<parallel>], iteration_bounds = array<i64: 1>, scalar_prefetch = 0 : i64, scratch_operands = 0 : i64, tpu.core_type = #tpu.core_type<tc>, window_params = [{transform_indices = @transform_0, window_bounds = array<i64: 8, 128>}, {transform_indices = @transform_1, window_bounds = array<i64: 8, 128>}]} {
    %c0 = arith.constant 0 : index
    %c0_0 = arith.constant 0 : index
    %0 = vector.load %arg1[%c0, %c0_0] : memref<8x128xf32, #tpu.memory_space<vmem>>, vector<8x128xf32>
    %1 = tpu.iota {dimensions = array<i32: 1>} : vector<1x128xi32>
    %c1_i32 = arith.constant 1 : i32
    %2 = vector.broadcast %c1_i32 : i32 to vector<1x128xi32>
    %3 = arith.andi %1, %2 : vector<1x128xi32>
    %c0_i32 = arith.constant 0 : i32
    %4 = vector.broadcast %c0_i32 : i32 to vector<1x128xi32>
    %5 = arith.cmpi eq, %3, %4 : vector<1x128xi32>
    %c127_i32 = arith.constant 127 : i32
    %6 = tpu.dynamic_rotate %0 by %c127_i32 dim 1 : vector<8x128xf32>, i32 -> vector<8x128xf32>
    %c1_i32_1 = arith.constant 1 : i32
    %7 = tpu.dynamic_rotate %0 by %c1_i32_1 dim 1 : vector<8x128xf32>, i32 -> vector<8x128xf32>
    %cst = arith.constant 2.000000e+00 : f32
    %8 = vector.broadcast %cst : f32 to vector<8x128xf32>
    %9 = arith.mulf %8, %6 : vector<8x128xf32>
    %10 = math.sin %7 : vector<8x128xf32>
    %cst_2 = arith.constant -3.000000e+00 : f32
    %11 = vector.broadcast %cst_2 : f32 to vector<8x128xf32>
    %12 = arith.mulf %10, %11 : vector<8x128xf32>
    %cst_3 = arith.constant 2.000000e-01 : f32
    %13 = vector.broadcast %cst_3 : f32 to vector<8x128xf32>
    %14 = arith.mulf %13, %0 : vector<8x128xf32>
    %15 = arith.subf %12, %14 : vector<8x128xf32>
    %16 = vector.shape_cast %5 : vector<1x128xi1> to vector<1x128xi1>
    %17 = vector.broadcast %16 : vector<1x128xi1> to vector<8x128xi1>
    %18 = arith.select %17, %9, %15 : vector<8x128xi1>, vector<8x128xf32>
    %c0_4 = arith.constant 0 : index
    %c0_5 = arith.constant 0 : index
    %19 = vector.load %arg2[%c0_4, %c0_5] : memref<8x128xf32, #tpu.memory_space<vmem>>, vector<8x128xf32>
    tpu.vector_store %arg2[%c0_4, %c0_5], %18 {strides = array<i32>} : memref<8x128xf32, #tpu.memory_space<vmem>>, vector<8x128xf32>,
    return
  }
  func.func @transform_0(%arg0: i32) -> (i32, i32) {
    %c0_i32 = arith.constant 0 : i32
    %c0_i32_0 = arith.constant 0 : i32
    return %arg0, %c0_i32 : i32, i32
  }
  func.func @transform_1(%arg0: i32) -> (i32, i32) {
    %c0_i32 = arith.constant 0 : i32
    %c0_i32_0 = arith.constant 0 : i32
    return %arg0, %c0_i32 : i32, i32
  }
}

</mosaic_0001>

<llo_original>
// kernel: ode_pendulum_field.1
$region0: #{ode_pendulum_field.1}
  #allocation0 [shape = 'u32[]', space=smem, size = 0x4, offset = 0x4, fixed_abs, tag = 'smem constant byte address 0x4 - core index']
  #allocation1 [shape = 'u32[72,128]{1,0:T(1,128)}', space=vmem, size = 0x9000, scoped, tag = 'internal scratch']
  %s0 = inlined_call_operand.vmem [shape: f32[8,128], index: 0, kind: input, shape index: {}]
  %s1 = inlined_call_operand.vmem [shape: f32[8,128], index: 1, kind: output, shape index: {}]
  %s2 = sld [smem:[#allocation0]]
  $region14: #{ode_pendulum_field.1} parent=0
    _
  %s4 = ssub.s32 1, %s2
  %s5 = scalar_select 0, %s4, %s2
  // Predicated region
  $region2: #{ode_pendulum_field.1} parent=0 // pred_check
    _
  $region3: #{ode_pendulum_field.1} parent=0 // pred_check_branch
    %7 = sbr.rel (0) target = $region5
  $region4: #{ode_pendulum_field.1} parent=0 // pred_region
    _
  $region5: #{ode_pendulum_field.1} parent=0 // pred_fallthru
    _
  %v8 = vld [vmem:[%s0] sm:$0xff]
  %v9 = vlaneseq
  %v10 = vand.u32 %v9, 127
  %v11 = vand.u32 %v10, 1
  %vm12 = vcmp.eq.s32.totalorder %v11, 0
  %13 = vrot.lane.b32.xlu0 %v8, 127
  %v14 = vpop.permute.xlu0 %13
  %15 = vrot.lane.b32.xlu0 %v8, 1
  %v16 = vpop.permute.xlu0 %15
  %v17 = vmul.f32 %v14, 2.0
  %v18 = vand.u32 2147483647, %v16
  %vm19 = vcmp.le.f32.partialorder %v18, 0.7853982
  %vm20 = vcmp.lt.s32.totalorder %v16, 0
  %v21 = vand.u32 %v16, 2139095040
  %v22 = vshrl.u32 %v21, 23
  %v23 = vsub.s32 %v22, 127
  %v24 = vand.u32 2147483647, %v16
  %v25 = vand.u32 %v24, 8388607
  %v26 = vor.u32 %v25, 8388608
  %v27 = vsub.s32 0, %v26
  %v28 = vadd.s32 %v23, 1
  %vm29 = vcmp.gt.s32.totalorder %v28, 0
  %v30 = vsel %vm29, %v28, 0
  %v31 = vshrl.u32 %v30, 5
  %v32 = vand.u32 %v30, 31
  %v33 = vsub.s32 32, %v32
  %v34 = vshrl.u32 683565275, %v33
  %v35 = vshll.u32 683565275, %v32
  %v36 = vshrl.u32 2475754826, %v33
  %v37 = vor.u32 %v35, %v36
  %v38 = vshll.u32 2475754826, %v32
  %v39 = vshrl.u32 2131351028, %v33
  %v40 = vor.u32 %v38, %v39
  %v41 = vshll.u32 2131351028, %v32
  %v42 = vshrl.u32 2102212464, %v33
  %v43 = vor.u32 %v41, %v42
  %v44 = vshll.u32 2102212464, %v32
  %v45 = vshrl.u32 920167782, %v33
  %v46 = vor.u32 %v44, %v45
  %v47 = vshll.u32 920167782, %v32
  %v48 = vshrl.u32 1326507024, %v33
  %v49 = vor.u32 %v47, %v48
  %vm50 = vcmp.lt.s32.totalorder %v31, 1
  %vm51 = vcmp.lt.s32.totalorder %v31, 2
  %vm52 = vcmp.lt.s32.totalorder %v31, 3
  %vm53 = vcmp.lt.s32.totalorder %v31, 4
  %v54 = vsel %vm50, %v34, %v37
  %v55 = vsel %vm53, %v43, 2102212464
  %v56 = vsel %vm52, %v40, %v55
  %v57 = vsel %vm51, %v54, %v56
  %v58 = vsel %vm50, %v37, %v40
  %v59 = vsel %vm53, %v46, 920167782
  %v60 = vsel %vm52, %v43, %v59
  %v61 = vsel %vm51, %v58, %v60
  %v62 = vsel %vm50, %v40, %v43
  %v63 = vsel %vm53, %v49, 1326507024
  %v64 = vsel %vm52, %v46, %v63
  %v65 = vsel %vm51, %v62, %v64
  %v66 = vshll.u32 %v26, 8
  %v67 = vand.u32 %v66, 65535
  %v68 = vshrl.u32 %v66, 16
  %v69 = vand.u32 %v65, 65535
  %v70 = vshrl.u32 %v65, 16
  %v71 = vmul.u32 %v67, %v69
  %v72 = vmul.u32 %v67, %v70
  %v73 = vmul.u32 %v68, %v69
  %v74 = vmul.u32 %v68, %v70
  %v75 = vshll.u32 %v72, 16
  %v76 = vshrl.u32 %v72, 16
  %v77 = vshll.u32 %v73, 16
  %v78 = vshrl.u32 %v73, 16
  %vm79 = vc.u32 %v71, %v75
  %v80 = vsel %vm79, 1, 0
  %v81 = vadd.s32 %v71, %v75
  %v82 = vadd.s32 %v74, %v80
  %vm83 = vc.u32 %v81, %v77
  %v84 = vsel %vm83, 1, 0
  %v85 = vadd.s32 %v81, %v77
  %v86 = vadd.s32 %v82, %v84
  %v87 = vadd.s32 %v86, %v76
  %v88 = vadd.s32 %v87, %v78
  %v89 = vand.u32 %v66, 65535
  %v90 = vshrl.u32 %v66, 16
  %v91 = vand.u32 %v61, 65535
  %v92 = vshrl.u32 %v61, 16
  %v93 = vmul.u32 %v89, %v91
  %v94 = vmul.u32 %v89, %v92
  %v95 = vmul.u32 %v90, %v91
  %v96 = vmul.u32 %v90, %v92
  %v97 = vshll.u32 %v94, 16
  %v98 = vshrl.u32 %v94, 16
  %v99 = vshll.u32 %v95, 16
  %v100 = vshrl.u32 %v95, 16
  %vm101 = vc.u32 %v93, %v97
  %v102 = vsel %vm101, 1, 0
  %v103 = vadd.s32 %v93, %v97
  %v104 = vadd.s32 %v96, %v102
  %vm105 = vc.u32 %v103, %v99
  %v106 = vsel %vm105, 1, 0
  %v107 = vadd.s32 %v103, %v99
  %v108 = vadd.s32 %v104, %v106
  %v109 = vadd.s32 %v108, %v98
  %v110 = vadd.s32 %v109, %v100
  %v111 = vmul.u32 %v66, %v57
  %v112 = vadd.s32 %v88, %v107
  %vm113 = vc.u32 %v88, %v107
  %v114 = vadd.s32 %v110, 1
  %v115 = vsel %vm113, %v114, %v110
  %v116 = vadd.s32 %v111, %v115
  %v117 = vadd.s32 %v116, 536870912
  %v118 = vshrl.u32 %v117, 30
  %v119 = vshll.u32 %v118, 30
  %v120 = vsub.s32 %v116, %v119
  %vm121 = vcmp.lt.s32.totalorder %v120, 0
  %v122 = vsub.s32 0, %v120
  %v123 = vsel %vm121, %v122, %v120
  %v124 = vclz %v123
  %v125 = vsub.s32 %v124, 2
  %vm126 = vcmp.gt.s32.totalorder 0, %v125
  %v127 = vsel %vm126, 0, %v125
  %v128 = vsub.s32 32, %v127
  %v129 = vshll.u32 %v120, %v127
  %v130 = vshrl.u32 %v112, %v128
  %v131 = vor.u32 %v129, %v130
  %v132 = vsub.s32 4294967266, %v127
  %v133 = vadd.s32 %v132, 127
  %v134 = vshll.u32 %v133, 23
  %v135 = vor.u32 4788187, %v134
  %v136 = vand.u32 2147483647, %v135
  %v138 = vcvt.s32.f32 %v131
  %v139 = vmul.f32 %v138, %v136
  %v140 = vxor.u32 %v139, 2147483648
  %v141 = vsel %vm20, %v140, %v139
  %v142 = vsub.s32 4, %v118
  %v143 = vsel %vm20, %v142, %v118
  %v144 = vsel %vm19, %v16, %v141
  %v145 = vsel %vm19, 0, %v143
  %v146 = vmul.f32 %v144, %v144
  %v147 = vmul.f32 %v146, -0.001358992
  %v148 = vadd.f32 %v147, 0.041655596
  %v149 = vmul.f32 %v146, %v148
  %v150 = vadd.f32 %v149, -0.4999988
  %v151 = vmul.f32 %v146, %v150
  %v152 = vadd.f32 1.0, %v151
  %v153 = vmul.f32 %v144, %v144
  %v154 = vmul.f32 %v153, -0.00019511016
  %v155 = vadd.f32 %v154, 0.008332121
  %v156 = vmul.f32 %v153, %v155
  %v157 = vadd.f32 %v156, -0.16666654
  %v158 = vmul.f32 %v153, %v157
  %v159 = vadd.f32 %v158, 1.0
  %v160 = vmul.f32 %v159, %v144
  %vm161 = vweird.f32 %v16
  %v162 = vadd.s32 %v145, 3
  %v163 = vand.u32 %v162, 3
  %vm164 = vcmp.lt.s32.totalorder %v163, 2
  %vm165 = vcmp.eq.s32.totalorder %v163, 0
  %v166 = vxor.u32 %v160, 2147483648
  %v167 = vsel %vm165, %v152, %v166
  %vm168 = vcmp.eq.s32.totalorder %v163, 2
  %v169 = vxor.u32 %v152, 2147483648
  %v170 = vsel %vm168, %v169, %v160
  %v171 = vsel %vm164, %v167, %v170
  %v172 = vsel %vm161, nan, %v171
  %v173 = vmul.f32 %v172, -3.0
  %v174 = vmul.f32 %v8, 0.2
  %v175 = vsub.f32 %v173, %v174
  %v176 = vsel %vm12, 1, 0
  %vm177 = vcmp.eq.s32.totalorder %v176, 1
  %v178 = vsel %vm177, %v17, %v175
  %179 = vst [vmem:[%s1] sm:$0xff] %v178
  // Predicated region
  $region6: #{ode_pendulum_field.1} parent=0 // pred_check
    _
  $region7: #{ode_pendulum_field.1} parent=0 // pred_check_branch
    %181 = sbr.rel (0) target = $region9
  $region8: #{ode_pendulum_field.1} parent=0 // pred_region
    _
  $region9: #{ode_pendulum_field.1} parent=0 // pred_fallthru
    _
  // Predicated region
  $region10: #{ode_pendulum_field.1} parent=0 // pred_check
    _
  $region11: #{ode_pendulum_field.1} parent=0 // pred_check_branch
    %183 = sbr.rel (0) target = $region13
  $region12: #{ode_pendulum_field.1} parent=0 // pred_region
    _
  $region13: #{ode_pendulum_field.1} parent=0 // pred_fallthru
    _

</llo_original>
